<compile_context>
chip_gen: v5e
topology: v5e:2x2
jax: 0.10.0
libtpu: 0.0.40
codegen_flags: <defaults>
</compile_context>

<pallas_src>
import functools

import jax
import jax.numpy as jnp
from jax import lax
from jax.experimental import pallas as pl
from jax.experimental.pallas import tpu as pltpu


def _wls_kernel(*refs, n_strips, strip, C, uniform_w, use_mxu, has_weights,
                batched):
    if has_weights:
        w_ref, x_ref, o_ref = refs
    else:
        x_ref, o_ref = refs
        w_ref = None

    inv_c = 1.0 / C  # compile-time scalar for the channel mean

    if not batched:
        # x_ref / o_ref: (C, T) — batch dim squeezed out (one element per step).
        if has_weights:
            # Hoisted once: JAX does not CSE broadcast_in_dim, so doing this
            # inside the (unrolled) strip loop would repeat the broadcast.
            w_b = jnp.broadcast_to(w_ref[...].astype(jnp.float32), (C, strip))
        else:
            w_b = uniform_w  # python scalar folds straight into the VALU add
        ones_row = jnp.ones((1, C), dtype=jnp.float32) if use_mxu else None

        def body(s, carry):
            j = pl.multiple_of(s * strip, strip)
            x = x_ref[:, pl.ds(j, strip)].astype(jnp.float32)        # (C, strip)
            if use_mxu:
                # Channel sums on the otherwise-idle MXU (large C).
                offset = jnp.dot(ones_row, x,
                                 preferred_element_type=jnp.float32) * inv_c
            else:
                offset = jnp.sum(x, axis=0, keepdims=True) * inv_c   # (1, strip)
            clamped = jnp.clip(w_b + x - offset, 0.0, 1.0)           # (C, strip)
            if use_mxu:
                norm = jnp.dot(ones_row, clamped,
                               preferred_element_type=jnp.float32)
            else:
                norm = jnp.sum(clamped, axis=0, keepdims=True)
            inv = pl.reciprocal(norm, approx=True)                   # EUP slot
            o_ref[:, pl.ds(j, strip)] = (clamped * inv).astype(o_ref.dtype)
            return carry
    else:
        # x_ref / o_ref: (bb, C, T) — several batch elements per grid step.
        bb = x_ref.shape[0]
        if has_weights:
            w_b = jnp.broadcast_to(
                w_ref[...].astype(jnp.float32).reshape(1, C, 1),
                (bb, C, strip))
        else:
            w_b = uniform_w

        def body(s, carry):
            j = pl.multiple_of(s * strip, strip)
            x = x_ref[:, :, pl.ds(j, strip)].astype(jnp.float32)     # (bb,C,strip)
            offset = jnp.sum(x, axis=-2, keepdims=True) * inv_c      # (bb,1,strip)
            clamped = jnp.clip(w_b + x - offset, 0.0, 1.0)
            norm = jnp.sum(clamped, axis=-2, keepdims=True)
            inv = pl.reciprocal(norm, approx=True)
            o_ref[:, :, pl.ds(j, strip)] = (clamped * inv).astype(o_ref.dtype)
            return carry

    unroll = n_strips if n_strips <= 16 else 8
    lax.fori_loop(0, n_strips, body, 0, unroll=unroll)


def weighted_linear_softmax_pallas(x, weights=None, *, max_tile=16384):
    """x: NCHW array [B, C, H, W]. Weighted linear softmax over dim=1."""
    B, C, H, W = x.shape
    n = H * W
    x3 = x.reshape(B, C, n)  # free, contiguous view

    in_item = jnp.dtype(x.dtype).itemsize

    # Generation-aware VMEM budget (v5e/v6e: 128 MiB physical; v7x: 64 MiB).
    try:
        vmem_phys = pltpu.get_tpu_info().vmem_capacity_bytes
    except Exception:
        vmem_phys = 64 * 1024 * 1024
    if vmem_phys >= 96 * 1024 * 1024:
        vmem_budget = 48 * 1024 * 1024
        vmem_limit = 96 * 1024 * 1024
    else:
        vmem_budget = 20 * 1024 * 1024
        vmem_limit = 32 * 1024 * 1024

    # Dtype-aware lane cap: double-buffered input + output tiles per batch elem.
    per_lane_bytes = 2 * (in_item + in_item) * C
    lane_cap = max(128, (vmem_budget // per_lane_bytes) // 128 * 128)

    # In-kernel strip width: keep live f32 temporaries (~rows*strip*4 bytes
    # each) well under the 64-vreg file.
    def _strip_for(rows):
        return max(128, min(512, ((24 * 1024) // (4 * rows)) // 128 * 128))

    strip = _strip_for(C)
    lanes_128 = pl.cdiv(n, 128) * 128
    tile = int(min(max_tile, lane_cap, lanes_128))
    tile = max(128, (tile // 128) * 128)
    strip = min(strip, tile)
    while tile % strip:
        strip -= 128

    # Pack several batch elements per grid step when the spatial extent is
    # small (amortizes per-step overhead, larger DMAs).
    bb = 1
    if tile >= lanes_128 and B > 1:
        bb = min(B, max(1, 4096 // tile),
                 max(1, vmem_budget // (per_lane_bytes * tile)))
        if bb > 1:
            strip = max(128, min(strip, _strip_for(bb * C)))
            while tile % strip:
                strip -= 128
    n_strips = tile // strip

    use_mxu = (bb == 1) and (C >= 64)
    has_weights = weights is not None

    kernel = functools.partial(
        _wls_kernel, n_strips=n_strips, strip=strip, C=C,
        uniform_w=1.0 / C, use_mxu=use_mxu, has_weights=has_weights,
        batched=(bb > 1))

    if bb > 1:
        x_spec = pl.BlockSpec((bb, C, tile), lambda b, i: (b, 0, i))
        o_spec = pl.BlockSpec((bb, C, tile), lambda b, i: (b, 0, i))
    else:
        x_spec = pl.BlockSpec((pl.Squeezed(), C, tile), lambda b, i: (b, 0, i))
        o_spec = pl.BlockSpec((pl.Squeezed(), C, tile), lambda b, i: (b, 0, i))

    in_specs = []
    operands = []
    if has_weights:
        w2d = jnp.asarray(weights, dtype=jnp.float32).reshape(C, 1)
        in_specs.append(pl.BlockSpec((C, 1), lambda b, i: (0, 0)))
        operands.append(w2d)
    in_specs.append(x_spec)
    operands.append(x3)

    bytes_accessed = 2 * B * C * n * in_item + (C * 4 if has_weights else 0)
    cost = pl.CostEstimate(flops=6 * B * C * n,
                           transcendentals=B * n,
                           bytes_accessed=bytes_accessed)

    grid = (pl.cdiv(B, bb), pl.cdiv(n, tile))

    out3 = pl.pallas_call(
        kernel,
        out_shape=jax.ShapeDtypeStruct((B, C, n), x.dtype),
        grid_spec=pltpu.PrefetchScalarGridSpec(
            num_scalar_prefetch=0,
            grid=grid,
            in_specs=in_specs,
            out_specs=o_spec),
        compiler_params=pltpu.CompilerParams(
            dimension_semantics=("parallel", "parallel"),
            vmem_limit_bytes=vmem_limit),
        cost_estimate=cost,
    )(*operands)

    return out3.reshape(B, C, H, W)


def _reference(x, weights=None):
    B, C, H, W = x.shape
    if weights is None:
        w = jnp.full((1, C, 1, 1), 1.0 / C, dtype=jnp.float32)
    else:
        w = jnp.asarray(weights, dtype=jnp.float32).reshape(1, C, 1, 1)
    xf = x.astype(jnp.float32)
    offset = jnp.mean(xf, axis=1, keepdims=True)
    clamped = jnp.clip(w + xf - offset, 0.0, 1.0)
    norm = jnp.sum(clamped, axis=1, keepdims=True)
    return (clamped / norm).astype(x.dtype)


if __name__ == "__main__":
    key = jax.random.PRNGKey(0)
    cases = [
        # (shape, weights) — covers: batch packing, lane-edge padding,
        # the MXU channel-sum path, and the explicit-weights path.
        ((2, 4, 16, 16), None),
        ((2, 4, 40, 40), None),
        ((1, 64, 8, 32), None),
        ((2, 4, 16, 16), jnp.array([0.1, 0.2, 0.3, 0.4], dtype=jnp.float32)),
        ((1, 64, 8, 32), jnp.full((64,), 1.0 / 64, dtype=jnp.float32)),
    ]
    for idx, (shape, w) in enumerate(cases):
        k = jax.random.fold_in(key, idx)
        x = jax.random.normal(k, shape, dtype=jnp.float32)
        out = jax.block_until_ready(weighted_linear_softmax_pallas(x, w))
        ref = _reference(x, w)
        assert out.shape == x.shape and out.dtype == x.dtype
        # approx reciprocal (EUP vrcp) -> slightly relaxed tolerance vs exact /
        assert jnp.allclose(out, ref, atol=2e-3, rtol=2e-3), f"case {idx} mismatch"
    print("KERNEL_OK")
</pallas_src>

<mosaic_0001>
module attributes {stable_mosaic.version = 11 : i64} {
  func.func @_wls_kernel(%arg0: i32, %arg1: i32, %arg2: memref<2x4x256xf32, #tpu.memory_space<vmem>>, %arg3: memref<2x4x256xf32, #tpu.memory_space<vmem>>) attributes {dimension_semantics = [#tpu.dimension_semantics<parallel>, #tpu.dimension_semantics<parallel>], iteration_bounds = array<i64: 1, 1>, scalar_prefetch = 0 : i64, scratch_operands = 0 : i64, tpu.core_type = #tpu.core_type<tc>, window_params = [{transform_indices = @transform_0, window_bounds = array<i64: 2, 4, 256>}, {transform_indices = @transform_1, window_bounds = array<i64: 2, 4, 256>}]} {
    %c0_i32 = arith.constant 0 : i32
    %c256_i32 = arith.constant 256 : i32
    %0 = arith.muli %c0_i32, %c256_i32 : i32
    %1 = tpu.assume_multiple %0, 256 : i32
    %c0 = arith.constant 0 : index
    %c0_0 = arith.constant 0 : index
    %2 = arith.index_cast %1 : i32 to index
    %3 = vector.load %arg2[%c0, %c0_0, %2] : memref<2x4x256xf32, #tpu.memory_space<vmem>>, vector<2x4x256xf32>
    %cst = arith.constant dense<0.000000e+00> : vector<2x256xf32>
    %4 = vector.multi_reduction <add>, %3, %cst [1] : vector<2x4x256xf32> to vector<2x256xf32>
    %5 = vector.shape_cast %4 : vector<2x256xf32> to vector<2x1x256xf32>
    %cst_1 = arith.constant 2.500000e-01 : f32
    %6 = vector.broadcast %cst_1 : f32 to vector<2x1x256xf32>
    %7 = arith.mulf %5, %6 : vector<2x1x256xf32>
    %cst_2 = arith.constant 2.500000e-01 : f32
    %8 = vector.broadcast %cst_2 : f32 to vector<2x4x256xf32>
    %9 = arith.addf %8, %3 : vector<2x4x256xf32>
    %10 = vector.broadcast %7 : vector<2x1x256xf32> to vector<2x4x256xf32>
    %11 = arith.subf %9, %10 : vector<2x4x256xf32>
    %cst_3 = arith.constant 0.000000e+00 : f32
    %cst_4 = arith.constant 1.000000e+00 : f32
    %12 = vector.broadcast %cst_3 : f32 to vector<2x4x256xf32>
    %13 = arith.maximumf %12, %11 : vector<2x4x256xf32>
    %14 = vector.broadcast %cst_4 : f32 to vector<2x4x256xf32>
    %15 = arith.minimumf %14, %13 : vector<2x4x256xf32>
    %cst_5 = arith.constant dense<0.000000e+00> : vector<2x256xf32>
    %16 = vector.multi_reduction <add>, %15, %cst_5 [1] : vector<2x4x256xf32> to vector<2x256xf32>
    %17 = vector.shape_cast %16 : vector<2x256xf32> to vector<2x1x256xf32>
    %18 = tpu.reciprocal %17 {approx = true} : vector<2x1x256xf32> -> vector<2x1x256xf32>
    %19 = vector.broadcast %18 : vector<2x1x256xf32> to vector<2x4x256xf32>
    %20 = arith.mulf %15, %19 : vector<2x4x256xf32>
    %c0_6 = arith.constant 0 : index
    %c0_7 = arith.constant 0 : index
    %21 = arith.index_cast %1 : i32 to index
    %22 = vector.load %arg3[%c0_6, %c0_7, %21] : memref<2x4x256xf32, #tpu.memory_space<vmem>>, vector<2x4x256xf32>
    tpu.vector_store %arg3[%c0_6, %c0_7, %21], %20 {strides = array<i32>} : memref<2x4x256xf32, #tpu.memory_space<vmem>>, vector<2x4x256xf32>,
    %c1_i32 = arith.constant 1 : i32
    return
  }
  func.func @transform_0(%arg0: i32, %arg1: i32) -> (i32, i32, i32) {
    %c0_i32 = arith.constant 0 : i32
    %c0_i32_0 = arith.constant 0 : i32
    return %arg0, %c0_i32, %arg1 : i32, i32, i32
  }
  func.func @transform_1(%arg0: i32, %arg1: i32) -> (i32, i32, i32) {
    %c0_i32 = arith.constant 0 : i32
    %c0_i32_0 = arith.constant 0 : i32
    return %arg0, %c0_i32, %arg1 : i32, i32, i32
  }
}

</mosaic_0001>

<llo_original>
// kernel: tpu_custom_call.1
$region0: #{tpu_custom_call.1}
  #allocation0 [shape = 'u32[]', space=smem, size = 0x4, offset = 0x4, fixed_abs, tag = 'smem constant byte address 0x4 - core index']
  #allocation1 [shape = 'u32[72,128]{1,0:T(1,128)}', space=vmem, size = 0x9000, scoped, tag = 'internal scratch']
  %s0 = inlined_call_operand.hbm [shape: f32[2,4,256], index: 0, kind: input, shape index: {}]
  %s1 = inlined_call_operand.hbm [shape: f32[2,4,256], index: 1, kind: output, shape index: {}]
  %s2 = sld [smem:[#allocation0]]
  $region18: #{tpu_custom_call.1} parent=0
    _
  %s4 = ssub.s32 1, %s2
  %s5 = scalar_select 0, %s4, %s2
  $region1: #{tpu_custom_call.1} parent=0
    #allocation2 [shape = 'u8[8192]{0}', space=vmem, size = 0x2000, scoped, tag = 'input window, operand 0, single buffered']
    #allocation3 [shape = 's32[1]{0}', space=sflag, size = 0x4, scoped, tag = 'scoped memory for tpu_custom_call.1']
    #allocation4 [shape = 's32[1]{0}', space=sflag, size = 0x4, scoped, tag = 'scoped memory for tpu_custom_call.1']
    #allocation5 [shape = 'u8[8192]{0}', space=vmem, size = 0x2000, scoped, tag = 'output window, operand 0, single buffered']
    %6 = vsyncpa [#allocation3], 0
    %7 = vsyncpa [#allocation4], 0
    // Predicated region
    $region2: #{tpu_custom_call.1} parent=1 // pred_check
      _
    $region3: #{tpu_custom_call.1} parent=1 // pred_check_branch
      %9 = sbr.rel (0) target = $region5
    $region4: #{tpu_custom_call.1} parent=1 // pred_region
      %11 = vsyncadd [#allocation3], 0
      %s12 = sshll.u32 %s0, 4
      %s13 = int_to_ptr.hbm [resolvable:$true] %s12
      %s14 = sshll.u32 [#allocation2], 4
      %s15 = int_to_ptr.vmem [resolvable:$true] %s14
      %20 = dma.hbm_to_vmem [thread:$0]  %s13, 256, %s15, [#allocation3], 128, 128, 8
    $region5: #{tpu_custom_call.1} parent=1 // pred_fallthru
      _
    // Predicated region
    $region6: #{tpu_custom_call.1} parent=1 // pred_check
      _
    $region7: #{tpu_custom_call.1} parent=1 // pred_check_branch
      %22 = sbr.rel (0) target = $region9
    $region8: #{tpu_custom_call.1} parent=1 // pred_region
      %24 = dma.done [#allocation3], 256
    $region9: #{tpu_custom_call.1} parent=1 // pred_fallthru
      _
    %v25 = vld [vmem:[#allocation2] sm:$0xff]
    %v26 = vld [vmem:[#allocation2 + $0x8] sm:$0xff]
    %29 = vst [vmem:[#allocation1] ss:$2 sm:$0xff] %v25
    %v30 = vld.sshfl [vmem:[#allocation1] sm:$0xff pattern:$0x75316420]
    %v31 = vld.sshfl [vmem:[#allocation1 + $0x8] sm:$0xff pattern:$0x75316420]
    %s32 = scalar_lea.vmem [#allocation1], 16
    %33 = vst [vmem:[%s32] ss:$2 sm:$0xff] %v26
    %v34 = vld.sshfl [vmem:[#allocation1 + $0x10] sm:$0xff pattern:$0x75316420]
    %v35 = vld.sshfl [vmem:[#allocation1 + $0x18] sm:$0xff pattern:$0x75316420]
    %vm40 = vcmask 1043456
    %v41 = vsel %vm40, %v30, 0.0
    %v42 = vrot.slane %v41, 4
    %v43 = vadd.f32 %v41, %v42
    %v44 = vrot.slane %v43, 2
    %v45 = vadd.f32 %v43, %v44
    %v46 = vrot.slane %v45, 1
    %v47 = vadd.f32 %v45, %v46
    %v48 = vsel %vm40, %v31, 0.0
    %v49 = vrot.slane %v48, 4
    %v50 = vadd.f32 %v48, %v49
    %v51 = vrot.slane %v50, 2
    %v52 = vadd.f32 %v50, %v51
    %v53 = vrot.slane %v52, 1
    %v54 = vadd.f32 %v52, %v53
    %v55 = vsel %vm40, %v34, 0.0
    %v56 = vrot.slane %v55, 4
    %v57 = vadd.f32 %v55, %v56
    %v58 = vrot.slane %v57, 2
    %v59 = vadd.f32 %v57, %v58
    %v60 = vrot.slane %v59, 1
    %v61 = vadd.f32 %v59, %v60
    %v62 = vsel %vm40, %v35, 0.0
    %v63 = vrot.slane %v62, 4
    %v64 = vadd.f32 %v62, %v63
    %v65 = vrot.slane %v64, 2
    %v66 = vadd.f32 %v64, %v65
    %v67 = vrot.slane %v66, 1
    %v68 = vadd.f32 %v66, %v67
    %v69 = vmul.f32 %v47, 0.25
    %v70 = vmul.f32 %v54, 0.25
    %v71 = vmul.f32 %v61, 0.25
    %v72 = vmul.f32 %v68, 0.25
    %v73 = vadd.f32 %v25, 0.25
    %v74 = vadd.f32 %v26, 0.25
    %v79 = vrot.slane %v70, 4
    %v80 = vrot.slane %v72, 4
    %v81 = vsel %vm40, %v69, %v79
    %v82 = vsel %vm40, %v71, %v80
    %v85 = vsub.f32 %v73, %v81
    %v86 = vsub.f32 %v74, %v82
    %v87 = vmax.f32 %v85, 0.0
    %v88 = vmax.f32 %v86, 0.0
    %v89 = vmin.f32 %v87, 1.0
    %v90 = vmin.f32 %v88, 1.0
    %93 = vst [vmem:[#allocation1] ss:$2 sm:$0xff] %v89
    %v94 = vld.sshfl [vmem:[#allocation1] sm:$0xff pattern:$0x75316420]
    %v95 = vld.sshfl [vmem:[#allocation1 + $0x8] sm:$0xff pattern:$0x75316420]
    %s96 = scalar_lea.vmem [#allocation1], 16
    %97 = vst [vmem:[%s96] ss:$2 sm:$0xff] %v90
    %v98 = vld.sshfl [vmem:[#allocation1 + $0x10] sm:$0xff pattern:$0x75316420]
    %v99 = vld.sshfl [vmem:[#allocation1 + $0x18] sm:$0xff pattern:$0x75316420]
    %v104 = vsel %vm40, %v94, 0.0
    %v105 = vrot.slane %v104, 4
    %v106 = vadd.f32 %v104, %v105
    %v107 = vrot.slane %v106, 2
    %v108 = vadd.f32 %v106, %v107
    %v109 = vrot.slane %v108, 1
    %v110 = vadd.f32 %v108, %v109
    %v111 = vsel %vm40, %v95, 0.0
    %v112 = vrot.slane %v111, 4
    %v113 = vadd.f32 %v111, %v112
    %v114 = vrot.slane %v113, 2
    %v115 = vadd.f32 %v113, %v114
    %v116 = vrot.slane %v115, 1
    %v117 = vadd.f32 %v115, %v116
    %v118 = vsel %vm40, %v98, 0.0
    %v119 = vrot.slane %v118, 4
    %v120 = vadd.f32 %v118, %v119
    %v121 = vrot.slane %v120, 2
    %v122 = vadd.f32 %v120, %v121
    %v123 = vrot.slane %v122, 1
    %v124 = vadd.f32 %v122, %v123
    %v125 = vsel %vm40, %v99, 0.0
    %v126 = vrot.slane %v125, 4
    %v127 = vadd.f32 %v125, %v126
    %v128 = vrot.slane %v127, 2
    %v129 = vadd.f32 %v127, %v128
    %v130 = vrot.slane %v129, 1
    %v131 = vadd.f32 %v129, %v130
    %v132 = vrcp.pop %v110
    %v133 = vrcp.pop %v117
    %v134 = vrcp.pop %v124
    %v135 = vrcp.pop %v131
    %v140 = vrot.slane %v133, 4
    %v141 = vrot.slane %v135, 4
    %v142 = vsel %vm40, %v132, %v140
    %v143 = vsel %vm40, %v134, %v141
    %v146 = vmul.f32 %v89, %v142
    %v147 = vmul.f32 %v90, %v143
    %148 = vst [vmem:[#allocation5] sm:$0xff] %v146
    %149 = vst [vmem:[#allocation5 + $0x8] sm:$0xff] %v147
    // Predicated region
    $region10: #{tpu_custom_call.1} parent=1 // pred_check
      _
    $region11: #{tpu_custom_call.1} parent=1 // pred_check_branch
      %151 = sbr.rel (0) target = $region13
    $region12: #{tpu_custom_call.1} parent=1 // pred_region
      %153 = vsyncadd [#allocation4], 0
      %s154 = sshll.u32 [#allocation5], 4
      %s155 = int_to_ptr.vmem [resolvable:$true] %s154
      %s156 = sshll.u32 %s1, 4
      %s157 = int_to_ptr.hbm [resolvable:$true] %s156
      %162 = dma.vmem_to_hbm [thread:$0]  %s155, 256, %s157, [#allocation4], 128, 128, 8
    $region13: #{tpu_custom_call.1} parent=1 // pred_fallthru
      _
    // Predicated region
    $region14: #{tpu_custom_call.1} parent=1 // pred_check
      _
    $region15: #{tpu_custom_call.1} parent=1 // pred_check_branch
      %164 = sbr.rel (0) target = $region17
    $region16: #{tpu_custom_call.1} parent=1 // pred_region
      %166 = dma.done [#allocation4], 256
    $region17: #{tpu_custom_call.1} parent=1 // pred_fallthru
      _
    %167 = vsyncpa [#allocation3], 1
    %168 = vsyncpa [#allocation4], 1

</llo_original>
